<compile_context>
chip_gen: v5e
topology: v5e:2x2
jax: 0.10.0
libtpu: 0.0.40
codegen_flags: <defaults>
</compile_context>

<pallas_src>
import functools

import jax
import jax.numpy as jnp
from jax.experimental import pallas as pl
from jax.experimental.pallas import tpu as pltpu


def _round_up(x: int, m: int) -> int:
    return (x + m - 1) // m * m


def _vmem_budget_bytes() -> int:
    """Per-generation VMEM budget (75% of capacity: ~48 MiB on v7x, ~96 MiB on v6e/v5e)."""
    try:
        cap = pltpu.get_tpu_info().vmem_capacity_bytes
    except Exception:
        cap = 64 * 1024 * 1024
    return int(cap) * 3 // 4


def _divisor_tiles(n_pad: int, candidates) -> list:
    return [t for t in candidates if t <= n_pad and n_pad % t == 0]


def _pick_row_tile(n_pad: int, per_row_bytes: int, resident_bytes: int, budget: int) -> int:
    """Largest row tile that (a) divides n_pad, (b) leaves >=2 row tiles, (c) fits VMEM."""
    tm_cap = max(8, n_pad // 2)
    cands = [t for t in _divisor_tiles(n_pad, (1024, 512, 256, 128, 64))
             if t <= tm_cap] or _divisor_tiles(n_pad, (128, 64, 32, 16, 8)) or [n_pad]
    for t in cands:
        if t * per_row_bytes + resident_bytes <= budget:
            return t
    return cands[-1]


def _pick_agg_tiles(n_pad: int, c_pad: int, a_bytes: int, z_bytes: int,
                    out_bytes: int, budget: int):
    """(tile_m, tile_k) for the Â @ Z kernel: VMEM-aware, >=2 row tiles, tile_k prefers 256x."""
    tm_cap = max(8, n_pad // 2)
    tm_cands = [t for t in _divisor_tiles(n_pad, (1024, 512, 256, 128, 64))
                if t <= tm_cap] or _divisor_tiles(n_pad, (128, 64, 32, 16, 8)) or [n_pad]
    tk_cands = _divisor_tiles(n_pad, (1024, 512, 256, 128)) or [n_pad]
    for tm in tm_cands:
        for tk in tk_cands:
            need = (2 * tm * tk * a_bytes          # Â tile, double-buffered
                    + 2 * tk * c_pad * z_bytes     # Z tile, double-buffered
                    + 2 * tm * c_pad * out_bytes   # output tile, double-buffered
                    + tm * c_pad * 4               # f32 accumulator scratch
                    + 2 * c_pad * 4)               # bias
            if need <= budget:
                return tm, tk
    return tm_cands[-1], tk_cands[-1]


def normalized_adjacency(edge_index, num_nodes: int, dtype=jnp.float32):
    """Dense GCN propagation matrix D^-1/2 (A + I) D^-1/2 from edge_index (2, E).

    Uses scatter-add for edges (duplicate edges accumulate, matching PyG gcn_norm)
    and always adds one self-loop per node.
    """
    src, dst = edge_index[0], edge_index[1]
    a = jnp.zeros((num_nodes, num_nodes), dtype).at[dst, src].add(1.0)
    a = a + jnp.eye(num_nodes, dtype=dtype)
    deg = a.sum(axis=1)
    d_inv_sqrt = jnp.where(deg > 0, jax.lax.rsqrt(deg), 0.0)
    return a * d_inv_sqrt[:, None] * d_inv_sqrt[None, :]


# ---------------------------------------------------------------------------
# Kernels
# ---------------------------------------------------------------------------

def _linear_kernel(x_ref, wt_ref, o_ref):
    # Z tile = X tile @ Wᵀ (weight pre-transposed in the wrapper), f32 MXU accumulation.
    o_ref[...] = jnp.dot(x_ref[...], wt_ref[...],
                         preferred_element_type=jnp.float32).astype(o_ref.dtype)


def _gcn_agg_kernel(a_ref, z_ref, b_ref, o_ref, acc_ref, *, negative_slope):
    # Contraction axis is grid axis 1 ("arbitrary", last): accumulate Â_tile @ Z_tile.
    @pl.when(pl.program_id(1) == 0)
    def _():
        acc_ref[...] = jnp.zeros_like(acc_ref)

    acc_ref[...] += jnp.dot(a_ref[...], z_ref[...],
                            preferred_element_type=jnp.float32)

    @pl.when(pl.program_id(1) == pl.num_programs(1) - 1)
    def _():
        h = acc_ref[...] + b_ref[...]
        # leaky_relu(h) == max(h, slope*h): single VALU max instead of cmp+select+mul.
        o_ref[...] = jnp.maximum(h, negative_slope * h).astype(o_ref.dtype)


# ---------------------------------------------------------------------------
# Wrappers
# ---------------------------------------------------------------------------

def _linear_padded(x_pad, wt_pad, out_dtype, budget):
    n_pad, kin_pad = x_pad.shape
    c_pad = wt_pad.shape[1]
    xb = jnp.dtype(x_pad.dtype).itemsize
    wb = jnp.dtype(wt_pad.dtype).itemsize
    ob = jnp.dtype(out_dtype).itemsize
    per_row = 2 * kin_pad * xb + 2 * c_pad * ob        # double-buffered X + out rows
    resident = 2 * kin_pad * c_pad * wb                # Wᵀ (conservatively double-buffered)
    tm = _pick_row_tile(n_pad, per_row, resident, budget)
    cost = pl.CostEstimate(
        flops=2 * n_pad * kin_pad * c_pad,
        transcendentals=0,
        bytes_accessed=n_pad * kin_pad * xb + kin_pad * c_pad * wb + n_pad * c_pad * ob)
    return pl.pallas_call(
        _linear_kernel,
        out_shape=jax.ShapeDtypeStruct((n_pad, c_pad), out_dtype),
        grid=(n_pad // tm,),
        in_specs=[
            pl.BlockSpec((tm, kin_pad), lambda i: (i, 0)),    # X row tile
            pl.BlockSpec((kin_pad, c_pad), lambda i: (0, 0)), # Wᵀ resident
        ],
        out_specs=pl.BlockSpec((tm, c_pad), lambda i: (i, 0)),
        compiler_params=pltpu.CompilerParams(
            dimension_semantics=("parallel",),
            vmem_limit_bytes=budget),
        cost_estimate=cost,
    )(x_pad, wt_pad)


def _gcn_aggregate_padded(a_pad, z_pad, b_pad, out_dtype, negative_slope, budget):
    n_pad = a_pad.shape[0]
    c_pad = z_pad.shape[1]
    ab = jnp.dtype(a_pad.dtype).itemsize
    zb = jnp.dtype(z_pad.dtype).itemsize
    ob = jnp.dtype(out_dtype).itemsize
    tm, tk = _pick_agg_tiles(n_pad, c_pad, ab, zb, ob, budget)
    cost = pl.CostEstimate(
        flops=2 * n_pad * n_pad * c_pad,
        transcendentals=0,
        bytes_accessed=n_pad * n_pad * ab + n_pad * c_pad * (zb + ob) + c_pad * 4)
    return pl.pallas_call(
        functools.partial(_gcn_agg_kernel, negative_slope=negative_slope),
        out_shape=jax.ShapeDtypeStruct((n_pad, c_pad), out_dtype),
        grid=(n_pad // tm, n_pad // tk),
        in_specs=[
            pl.BlockSpec((tm, tk), lambda i, k: (i, k)),       # Â tile
            pl.BlockSpec((tk, c_pad), lambda i, k: (k, 0)),    # Z tile (contraction)
            pl.BlockSpec((1, c_pad), lambda i, k: (0, 0)),     # bias resident
        ],
        out_specs=pl.BlockSpec((tm, c_pad), lambda i, k: (i, 0)),
        scratch_shapes=[pltpu.VMEM((tm, c_pad), jnp.float32)],
        compiler_params=pltpu.CompilerParams(
            dimension_semantics=("parallel", "arbitrary"),     # reduction axis last
            vmem_limit_bytes=budget),
        cost_estimate=cost,
    )(a_pad, z_pad, b_pad)


def gcn_layer_padded(a_pad, x_pad, w, b, *, negative_slope, stream_dtype, out_dtype, budget):
    """One fused GCNConv + activation layer on padded operands.

    a_pad: (N_pad, N_pad) zero-padded normalized adjacency (possibly bf16-streamed).
    x_pad: (N_pad, Kin_pad) zero-padded activations (padded rows/cols are zero).
    w, b : nn.Linear-convention weight (C, Kin) and bias (C,).
    Returns (N_pad, C_pad); padded columns stay zero, padded rows only hold
    leaky_relu(b) garbage that is killed by Â's zero columns in the next layer.
    """
    n_pad, kin_pad = x_pad.shape
    c, kin = w.shape
    c_pad = _round_up(c, 128)
    # Pre-transpose + zero-pad the weight once (no in-kernel .T / XLU relayout).
    wt_pad = jnp.zeros((kin_pad, c_pad), w.dtype).at[:kin, :c].set(w.T)
    b_pad = jnp.zeros((1, c_pad), jnp.float32).at[0, :c].set(b.astype(jnp.float32))
    # Z = X @ Wᵀ  (small matmul) -> the dominant N² matmul is only C_pad wide.
    z_dtype = stream_dtype if stream_dtype is not None else x_pad.dtype
    z = _linear_padded(x_pad, wt_pad, out_dtype=z_dtype, budget=budget)
    # H = leaky_relu(Â @ Z + b), f32 accumulation + f32 epilogue, output in out_dtype.
    return _gcn_aggregate_padded(a_pad, z, b_pad, out_dtype, negative_slope, budget)


def encoder_recoverability_forward(x, edge_index, params, negative_slope=0.01,
                                   stream_dtype=None):
    """EncoderRecoverability._internal_forward: returns [h_1, ..., h_k].

    params: list of (weight (C_out, C_in), bias (C_out,)) per GCNConv layer.
    The module's `activation` is assumed to be F.leaky_relu (slope 0.01).
    stream_dtype: optional dtype (e.g. jnp.bfloat16) for streaming Â and Z through the
    HBM-bound aggregation kernel; accumulation and outputs stay float32.
    """
    n, k0 = x.shape
    out_dtype = x.dtype
    budget = _vmem_budget_bytes()

    a_hat = normalized_adjacency(edge_index, n, jnp.float32)
    n_pad = _round_up(max(n, 8), 128)
    adj_dtype = stream_dtype if stream_dtype is not None else out_dtype
    a_pad = jnp.zeros((n_pad, n_pad), adj_dtype).at[:n, :n].set(a_hat.astype(adj_dtype))

    k0_pad = _round_up(k0, 128)
    cur = jnp.zeros((n_pad, k0_pad), out_dtype).at[:n, :k0].set(x)

    outs, dims = [], []
    for (w, b) in params:
        cur = gcn_layer_padded(a_pad, cur, w, b,
                               negative_slope=negative_slope,
                               stream_dtype=stream_dtype,
                               out_dtype=out_dtype,
                               budget=budget)
        outs.append(cur)
        dims.append(w.shape[0])
    # Activations stay padded between layers; slice to logical shapes only here.
    return [o[:n, :c] for o, c in zip(outs, dims)]


def reference_forward(x, edge_index, params, negative_slope=0.01):
    a_hat = normalized_adjacency(edge_index, x.shape[0], jnp.float32).astype(x.dtype)
    h = []
    cur = x
    for w, b in params:
        z = jnp.dot(jnp.dot(a_hat, cur, precision="highest"), w.T,
                    precision="highest") + b
        cur = jnp.maximum(z, negative_slope * z)
        h.append(cur)
    return h


if __name__ == "__main__":
    key = jax.random.PRNGKey(0)
    num_nodes, in_channels, out_channels = 8, 32, 16
    hidden = 2 * out_channels  # EncoderRecoverability with k=2: in -> 2*out -> out

    # Small undirected ring graph (edges in both directions).
    src = jnp.arange(num_nodes, dtype=jnp.int32)
    dst = (src + 1) % num_nodes
    edge_index = jnp.concatenate(
        [jnp.stack([src, dst]), jnp.stack([dst, src])], axis=1)  # (2, 16)

    k_x, k_w0, k_b0, k_w1, k_b1 = jax.random.split(key, 5)
    x = jax.random.normal(k_x, (num_nodes, in_channels), dtype=jnp.float32)
    lim0 = 1.0 / (in_channels ** 0.5)
    lim1 = 1.0 / (hidden ** 0.5)
    w0 = jax.random.uniform(k_w0, (hidden, in_channels), jnp.float32, -lim0, lim0)
    b0 = jax.random.uniform(k_b0, (hidden,), jnp.float32, -lim0, lim0)
    w1 = jax.random.uniform(k_w1, (out_channels, hidden), jnp.float32, -lim1, lim1)
    b1 = jax.random.uniform(k_b1, (out_channels,), jnp.float32, -lim1, lim1)
    params = [(w0, b0), (w1, b1)]

    # f32 path
    h1, h2 = encoder_recoverability_forward(x, edge_index, params)
    jax.block_until_ready(h2)

    r1, r2 = reference_forward(x, edge_index, params)
    assert h1.shape == (num_nodes, hidden), h1.shape
    assert h2.shape == (num_nodes, out_channels), h2.shape
    assert jnp.allclose(h1, r1, atol=1e-4, rtol=1e-4), "layer-1 mismatch vs reference"
    assert jnp.allclose(h2, r2, atol=1e-4, rtol=1e-4), "layer-2 mismatch vs reference"

    # bf16-streamed Â/Z path (f32 accumulation + f32 outputs); loose tolerance.
    g1, g2 = encoder_recoverability_forward(x, edge_index, params,
                                            stream_dtype=jnp.bfloat16)
    jax.block_until_ready(g2)
    assert g1.shape == (num_nodes, hidden) and g2.shape == (num_nodes, out_channels)
    assert jnp.allclose(g1, r1, atol=1e-1, rtol=1e-1), "bf16 layer-1 drifted too far"
    assert jnp.allclose(g2, r2, atol=1e-1, rtol=1e-1), "bf16 layer-2 drifted too far"

    print("KERNEL_OK")
</pallas_src>

<mosaic_0001>
module attributes {stable_mosaic.version = 11 : i64} {
  func.func @_linear_kernel(%arg0: i32, %arg1: memref<64x128xf32, #tpu.memory_space<vmem>>, %arg2: memref<128x128xf32, #tpu.memory_space<vmem>>, %arg3: memref<64x128xf32, #tpu.memory_space<vmem>>) attributes {dimension_semantics = [#tpu.dimension_semantics<parallel>], iteration_bounds = array<i64: 2>, scalar_prefetch = 0 : i64, scratch_operands = 0 : i64, tpu.core_type = #tpu.core_type<tc>, window_params = [{transform_indices = @transform_0, window_bounds = array<i64: 64, 128>}, {pipeline_mode = #tpu.pipeline_mode<synchronous>, transform_indices = @transform_1, window_bounds = array<i64: 128, 128>}, {transform_indices = @transform_2, window_bounds = array<i64: 64, 128>}]} {
    %c0 = arith.constant 0 : index
    %c0_0 = arith.constant 0 : index
    %0 = vector.load %arg1[%c0, %c0_0] : memref<64x128xf32, #tpu.memory_space<vmem>>, vector<64x128xf32>
    %c0_1 = arith.constant 0 : index
    %c0_2 = arith.constant 0 : index
    %1 = vector.load %arg2[%c0_1, %c0_2] : memref<128x128xf32, #tpu.memory_space<vmem>>, vector<128x128xf32>
    %cst = arith.constant dense<0.000000e+00> : vector<64x128xf32>
    %2 = tpu.matmul %0, %1, %cst {dimension_numbers = #tpu.dot_dimension_numbers<[1], [0], [0], [1], [0, 0, 1, 1], [], []>} : vector<64x128xf32>, vector<128x128xf32>, vector<64x128xf32> -> vector<64x128xf32>
    %c0_3 = arith.constant 0 : index
    %c0_4 = arith.constant 0 : index
    %3 = vector.load %arg3[%c0_3, %c0_4] : memref<64x128xf32, #tpu.memory_space<vmem>>, vector<64x128xf32>
    tpu.vector_store %arg3[%c0_3, %c0_4], %2 {strides = array<i32>} : memref<64x128xf32, #tpu.memory_space<vmem>>, vector<64x128xf32>,
    return
  }
  func.func @transform_0(%arg0: i32) -> (i32, i32) {
    %c0_i32 = arith.constant 0 : i32
    %c0_i32_0 = arith.constant 0 : i32
    return %arg0, %c0_i32 : i32, i32
  }
  func.func @transform_1(%arg0: i32) -> (i32, i32) {
    %c0_i32 = arith.constant 0 : i32
    %c0_i32_0 = arith.constant 0 : i32
    %c0_i32_1 = arith.constant 0 : i32
    return %c0_i32, %c0_i32_0 : i32, i32
  }
  func.func @transform_2(%arg0: i32) -> (i32, i32) {
    %c0_i32 = arith.constant 0 : i32
    %c0_i32_0 = arith.constant 0 : i32
    return %arg0, %c0_i32 : i32, i32
  }
}

</mosaic_0001>

<llo_original>
// kernel: tpu_custom_call.1
$region0: #{tpu_custom_call.1}
  #allocation0 [shape = 'u32[]', space=smem, size = 0x4, offset = 0x4, fixed_abs, tag = 'smem constant byte address 0x4 - core index']
  #allocation1 [shape = 'u32[72,128]{1,0:T(1,128)}', space=vmem, size = 0x9000, scoped, tag = 'internal scratch']
  %s0 = inlined_call_operand.hbm [shape: f32[128,128], index: 0, kind: input, shape index: {}]
  %s1 = inlined_call_operand.hbm [shape: f32[128,128], index: 1, kind: input, shape index: {}]
  %s2 = inlined_call_operand.hbm [shape: f32[128,128], index: 2, kind: output, shape index: {}]
  %s3 = sld [smem:[#allocation0]]
  $region49: #{tpu_custom_call.1} parent=0
    _
  %s5 = ssub.s32 1, %s3
  %s6 = scalar_select 0, %s5, %s3
  $region1: #{tpu_custom_call.1} parent=0
    #allocation2 [shape = 'u8[65536]{0}', space=vmem, size = 0x10000, scoped, tag = 'input window, operand 0']
    #allocation3 [shape = 's32[2]{0}', space=sflag, size = 0x8, scoped, tag = 'scoped memory for tpu_custom_call.1']
    #allocation4 [shape = 's32[2]{0}', space=sflag, size = 0x8, scoped, tag = 'scoped memory for tpu_custom_call.1']
    #allocation5 [shape = 'u8[65536]{0}', space=vmem, size = 0x10000, scoped, tag = 'input window, operand 1, single buffered']
    #allocation6 [shape = 's32[1]{0}', space=sflag, size = 0x4, scoped, tag = 'scoped memory for tpu_custom_call.1']
    #allocation7 [shape = 'u8[65536]{0}', space=vmem, size = 0x10000, scoped, tag = 'output window, operand 0']
    %7 = vsyncpa [#allocation3], 0
    %s8 = scalar_lea.sflag [#allocation3], 1
    %9 = vsyncpa %s8, 0
    %10 = vsyncpa [#allocation6], 0
    %11 = vsyncpa [#allocation4], 0
    %s12 = scalar_lea.sflag [#allocation4], 1
    %13 = vsyncpa %s12, 0
    loop: start=0, step=1, limit=4
    $region2: #{tpu_custom_call.1} parent=1 // loop_pre_header
      _
    $region3: #{tpu_custom_call.1} parent=1 // loop_header
      %s15 = sphi 0, %s19
      %p16 = scmp.ge.s32.totalorder %s15, 4
      %s25 = sphi 0, %s27
      %s28 = sphi 0, %s25
      %s29 = sphi 0, %s28
      %s45 = sphi 0, %s29
      %s49 = sphi 0, %s49
      %s51 = sphi 0, %s49
      %s52 = sphi 0, %s51
      %s66 = sphi 0, %s52
      %s72 = sphi 0, %s74
      %s75 = sphi 0, %s72
      %s76 = sphi 0, %s75
      %s92 = sphi 0, %s76
    $region4: #{tpu_custom_call.1} parent=1 // loop_header_branch
      %18 = sbr.rel (%p16) target = $region8
    $region5: #{tpu_custom_call.1} parent=1 // loop_body
      %s20 = ssub.s32 %s15, 1
      %s21 = ssub.s32 %s15, 2
      %s22 = sadd.s32 %s15, 1
      %s23 = ssub.s32 %s15, %s22
      %p24 = scmp.eq.s32.totalorder %s23, 0
      %s26 = sadd.s32 %s25, 1
      %s27 = scalar_select %p24, %s25, %s26
      %p30 = pneg %p24
      %p31 = scmp.eq.s32.totalorder %s15, 1
      %p32 = por %p30, %p31
      %p33 = scmp.ne.s32.totalorder %s25, %s28
      %p34 = scmp.eq.s32.totalorder %s15, 0
      %p35 = por %p33, %p34
      %p36 = scmp.ne.s32.totalorder %s25, %s28
      %p37 = scmp.eq.s32.totalorder %s20, 1
      %p38 = por %p36, %p37
      %p39 = scmp.ne.s32.totalorder %s28, %s29
      %p40 = scmp.eq.s32.totalorder %s20, 0
      %p41 = por %p39, %p40
      %p42 = scmp.ne.s32.totalorder %s28, %s29
      %p43 = scmp.eq.s32.totalorder %s21, 1
      %p44 = por %p42, %p43
      %p46 = scmp.ne.s32.totalorder %s29, %s45
      %p47 = scmp.eq.s32.totalorder %s21, 0
      %p48 = por %p46, %p47
      %s50 = sadd.s32 %s49, 1
      %p53 = scmp.eq.s32.totalorder %s15, 1
      %p54 = scmp.ne.s32.totalorder %s49, %s51
      %p55 = scmp.eq.s32.totalorder %s15, 0
      %p56 = por %p54, %p55
      %p57 = scmp.ne.s32.totalorder %s49, %s51
      %p58 = scmp.eq.s32.totalorder %s20, 1
      %p59 = por %p57, %p58
      %p60 = scmp.ne.s32.totalorder %s51, %s52
      %p61 = scmp.eq.s32.totalorder %s20, 0
      %p62 = por %p60, %p61
      %p63 = scmp.ne.s32.totalorder %s51, %s52
      %p64 = scmp.eq.s32.totalorder %s21, 1
      %p65 = por %p63, %p64
      %p67 = scmp.ne.s32.totalorder %s52, %s66
      %p68 = scmp.eq.s32.totalorder %s21, 0
      %p69 = por %p67, %p68
      %s70 = ssub.s32 %s15, %s22
      %p71 = scmp.eq.s32.totalorder %s70, 0
      %s73 = sadd.s32 %s72, 1
      %s74 = scalar_select %p71, %s72, %s73
      %p77 = pneg %p71
      %p78 = scmp.eq.s32.totalorder %s15, 1
      %p79 = por %p77, %p78
      %p80 = scmp.ne.s32.totalorder %s72, %s75
      %p81 = scmp.eq.s32.totalorder %s15, 0
      %p82 = por %p80, %p81
      %p83 = scmp.ne.s32.totalorder %s72, %s75
      %p84 = scmp.eq.s32.totalorder %s20, 1
      %p85 = por %p83, %p84
      %p86 = scmp.ne.s32.totalorder %s75, %s76
      %p87 = scmp.eq.s32.totalorder %s20, 0
      %p88 = por %p86, %p87
      %p89 = scmp.ne.s32.totalorder %s75, %s76
      %p90 = scmp.eq.s32.totalorder %s21, 1
      %p91 = por %p89, %p90
      %p93 = scmp.ne.s32.totalorder %s76, %s92
      %p94 = scmp.eq.s32.totalorder %s21, 0
      %p95 = por %p93, %p94
      %p96 = scmp.le.s32.totalorder 1, %s15
      %p97 = scmp.lt.s32.totalorder %s15, 3
      %p98 = pnand %p96, %p97
      %p99 = pneg %p98
      // Predicated region
      $region9: #{tpu_custom_call.1} parent=5 // pred_check
        _
      $region10: #{tpu_custom_call.1} parent=5 // pred_check_branch
        %101 = sbr.rel (%p98) target = $region12
      $region11: #{tpu_custom_call.1} parent=5 // pred_region
        %s102 = ssub.s32 %s15, 1
        // Predicated region
        $region13: #{tpu_custom_call.1} parent=11 // pred_check
          %p103 = pneg %p62
        $region14: #{tpu_custom_call.1} parent=11 // pred_check_branch
          %105 = sbr.rel (%p103) target = $region16
        $region15: #{tpu_custom_call.1} parent=11 // pred_region
          %107 = vsyncadd [#allocation6], 0
          %s108 = sshll.u32 %s1, 4
          %s109 = int_to_ptr.hbm [resolvable:$true] %s108
          %s110 = sshll.u32 [#allocation5], 4
          %s111 = int_to_ptr.vmem [resolvable:$true] %s110
          %116 = dma.hbm_to_vmem [thread:$0]  %s109, 2048, %s111, [#allocation6], 128, 128, 8
        $region16: #{tpu_custom_call.1} parent=11 // pred_fallthru
          _
      $region12: #{tpu_custom_call.1} parent=5 // pred_fallthru
        _
      %p117 = scmp.lt.s32.totalorder %s15, 2
      // Predicated region
      $region17: #{tpu_custom_call.1} parent=5 // pred_check
        %p118 = pneg %p117
      $region18: #{tpu_custom_call.1} parent=5 // pred_check_branch
        %120 = sbr.rel (%p118) target = $region20
      $region19: #{tpu_custom_call.1} parent=5 // pred_region
        // Predicated region
        $region21: #{tpu_custom_call.1} parent=19 // pred_check
          %p121 = pneg %p35
        $region22: #{tpu_custom_call.1} parent=19 // pred_check_branch
          %123 = sbr.rel (%p121) target = $region24
        $region23: #{tpu_custom_call.1} parent=19 // pred_region
          %s124 = sand.u32 %s25, 1
          %s125 = scalar_lea.sflag [#allocation3], %s124
          %s126 = sand.u32 %s25, 1
          %s127 = smul.addr %s126, 64
          %s128 = scalar_lea.vmem [#allocation2], %s127
          %s129 = smul.u32 8, %s15
          %131 = vsyncadd %s125, 0
          %s132 = smul.addr %s129, 8
          %s133 = scalar_lea.hbm %s0, %s132
          %s134 = sshll.u32 %s133, 4
          %s135 = int_to_ptr.hbm [resolvable:$true] %s134
          %s136 = sshll.u32 %s128, 4
          %s137 = int_to_ptr.vmem [resolvable:$true] %s136
          %142 = dma.hbm_to_vmem [thread:$0]  %s135, 1024, %s137, %s125, 128, 128, 8
        $region24: #{tpu_custom_call.1} parent=19 // pred_fallthru
          _
      $region20: #{tpu_custom_call.1} parent=5 // pred_fallthru
        _
      %p143 = scmp.le.s32.totalorder 1, %s15
      %p144 = scmp.lt.s32.totalorder %s15, 3
      %p145 = pnand %p143, %p144
      %p146 = pneg %p145
      // Predicated region
      $region25: #{tpu_custom_call.1} parent=5 // pred_check
        _
      $region26: #{tpu_custom_call.1} parent=5 // pred_check_branch
        %148 = sbr.rel (%p145) target = $region28
      $region27: #{tpu_custom_call.1} parent=5 // pred_region
        %s149 = ssub.s32 %s15, 1
        %s150 = sand.u32 %s28, 1
        %s151 = scalar_lea.sflag [#allocation3], %s150
        %s152 = sand.u32 %s28, 1
        %s153 = smul.addr %s152, 64
        %s154 = scalar_lea.vmem [#allocation2], %s153
        // Predicated region
        $region29: #{tpu_custom_call.1} parent=27 // pred_check
          %p155 = pneg %p41
        $region30: #{tpu_custom_call.1} parent=27 // pred_check_branch
          %157 = sbr.rel (%p155) target = $region32
        $region31: #{tpu_custom_call.1} parent=27 // pred_region
          %159 = dma.done %s151, 1024
        $region32: #{tpu_custom_call.1} parent=27 // pred_fallthru
          _
        // Predicated region
        $region33: #{tpu_custom_call.1} parent=27 // pred_check
          %p160 = pneg %p62
        $region34: #{tpu_custom_call.1} parent=27 // pred_check_branch
          %162 = sbr.rel (%p160) target = $region36
        $region35: #{tpu_custom_call.1} parent=27 // pred_region
          %164 = dma.done [#allocation6], 2048
        $region36: #{tpu_custom_call.1} parent=27 // pred_fallthru
          _
        %s165 = sand.u32 %s28, 1
        %s166 = scalar_lea.sflag [#allocation3], %s165
        %s167 = sand.u32 %s28, 1
        %s168 = smul.addr %s167, 64
        %s169 = scalar_lea.vmem [#allocation2], %s168
        %p170 = pneg %p41
        %p171 = pneg %p38
        %p172 = pneg %p62
        %p173 = pneg %p59
        %p174 = pneg %p88
        %p175 = pneg %p85
        %s176 = sand.u32 %s75, 1
        %s177 = scalar_lea.sflag [#allocation4], %s176
        %s178 = sand.u32 %s75, 1
        %s179 = smul.addr %s178, 64
        %s180 = scalar_lea.vmem [#allocation7], %s179
        %s181 = smul.u32 8, %s20
        %s182 = smul.u32 8, %s20
        %v183 = vld [vmem:[%s154] sm:$0xff]
        %v184 = vld [vmem:[%s154 + $0x8] sm:$0xff]
        %v185 = vld [vmem:[%s154 + $0x10] sm:$0xff]
        %v186 = vld [vmem:[%s154 + $0x18] sm:$0xff]
        %v187 = vld [vmem:[%s154 + $0x20] sm:$0xff]
        %v188 = vld [vmem:[%s154 + $0x28] sm:$0xff]
        %v189 = vld [vmem:[%s154 + $0x30] sm:$0xff]
        %v190 = vld [vmem:[%s154 + $0x38] sm:$0xff]
        %v191 = vld [vmem:[#allocation5] sm:$0xff]
        %v192 = vld [vmem:[#allocation5 + $0x8] sm:$0xff]
        %v193 = vld [vmem:[#allocation5 + $0x10] sm:$0xff]
        %v194 = vld [vmem:[#allocation5 + $0x18] sm:$0xff]
        %v195 = vld [vmem:[#allocation5 + $0x20] sm:$0xff]
        %v196 = vld [vmem:[#allocation5 + $0x28] sm:$0xff]
        %v197 = vld [vmem:[#allocation5 + $0x30] sm:$0xff]
        %v198 = vld [vmem:[#allocation5 + $0x38] sm:$0xff]
        %v199 = vld [vmem:[#allocation5 + $0x40] sm:$0xff]
        %v200 = vld [vmem:[#allocation5 + $0x48] sm:$0xff]
        %v201 = vld [vmem:[#allocation5 + $0x50] sm:$0xff]
        %v202 = vld [vmem:[#allocation5 + $0x58] sm:$0xff]
        %v203 = vld [vmem:[#allocation5 + $0x60] sm:$0xff]
        %v204 = vld [vmem:[#allocation5 + $0x68] sm:$0xff]
        %v205 = vld [vmem:[#allocation5 + $0x70] sm:$0xff]
        %v206 = vld [vmem:[#allocation5 + $0x78] sm:$0xff]
        %207 = vmatpush.msra.mxu0 %v206
        %208 = vmatpush.msra.mxu0 %v205
        %209 = vmatpush.msra.mxu0 %v204
        %210 = vmatpush.msra.mxu0 %v203
        %211 = vmatpush.msra.mxu0 %v202
        %212 = vmatpush.msra.mxu0 %v201
        %213 = vmatpush.msra.mxu0 %v200
        %214 = vmatpush.msra.mxu0 %v199
        %215 = vmatpush.msra.mxu0 %v198
        %216 = vmatpush.msra.mxu0 %v197
        %217 = vmatpush.msra.mxu0 %v196
        %218 = vmatpush.msra.mxu0 %v195
        %219 = vmatpush.msra.mxu0 %v194
        %220 = vmatpush.msra.mxu0 %v193
        %221 = vmatpush.msra.mxu0 %v192
        %222 = vmatpush.msra.mxu0 %v191
        %223 = vmatmul.f32.gmra.mxu0 %v183
        %v224 = vpop.f32.mrf.mxu0
        %v225 = vadd.f32 0.0, %v224
        %226 = vmatmul.f32.gmra.mxu0 %v184
        %v227 = vpop.f32.mrf.mxu0
        %v228 = vadd.f32 0.0, %v227
        %229 = vmatmul.f32.gmra.mxu0 %v185
        %v230 = vpop.f32.mrf.mxu0
        %v231 = vadd.f32 0.0, %v230
        %232 = vmatmul.f32.gmra.mxu0 %v186
        %v233 = vpop.f32.mrf.mxu0
        %v234 = vadd.f32 0.0, %v233
        %235 = vmatmul.f32.gmra.mxu0 %v187
        %v236 = vpop.f32.mrf.mxu0
        %v237 = vadd.f32 0.0, %v236
        %238 = vmatmul.f32.gmra.mxu0 %v188
        %v239 = vpop.f32.mrf.mxu0
        %v240 = vadd.f32 0.0, %v239
        %241 = vmatmul.f32.gmra.mxu0 %v189
        %v242 = vpop.f32.mrf.mxu0
        %v243 = vadd.f32 0.0, %v242
        %244 = vmatmul.f32.gmra.mxu0 %v190
        %v245 = vpop.f32.mrf.mxu0
        %v246 = vadd.f32 0.0, %v245
        %247 = vdwg.mxu0
        %248 = vst [vmem:[%s180] sm:$0xff] %v225
        %249 = vst [vmem:[%s180 + $0x8] sm:$0xff] %v228
        %250 = vst [vmem:[%s180 + $0x10] sm:$0xff] %v231
        %251 = vst [vmem:[%s180 + $0x18] sm:$0xff] %v234
        %252 = vst [vmem:[%s180 + $0x20] sm:$0xff] %v237
        %253 = vst [vmem:[%s180 + $0x28] sm:$0xff] %v240
        %254 = vst [vmem:[%s180 + $0x30] sm:$0xff] %v243
        %255 = vst [vmem:[%s180 + $0x38] sm:$0xff] %v246
        %s256 = sand.u32 %s75, 1
        %s257 = scalar_lea.sflag [#allocation4], %s256
        %s258 = sand.u32 %s75, 1
        %s259 = smul.addr %s258, 64
        %s260 = scalar_lea.vmem [#allocation7], %s259
        // Predicated region
        $region37: #{tpu_custom_call.1} parent=27 // pred_check
          %p261 = pneg %p85
        $region38: #{tpu_custom_call.1} parent=27 // pred_check_branch
          %263 = sbr.rel (%p261) target = $region40
        $region39: #{tpu_custom_call.1} parent=27 // pred_region
          %s264 = smul.u32 8, %s20
          %266 = vsyncadd %s257, 0
          %s267 = smul.addr %s264, 8
          %s268 = scalar_lea.hbm %s2, %s267
          %s269 = sshll.u32 %s260, 4
          %s270 = int_to_ptr.vmem [resolvable:$true] %s269
          %s271 = sshll.u32 %s268, 4
          %s272 = int_to_ptr.hbm [resolvable:$true] %s271
          %277 = dma.vmem_to_hbm [thread:$0]  %s270, 1024, %s272, %s257, 128, 128, 8
        $region40: #{tpu_custom_call.1} parent=27 // pred_fallthru
          _
      $region28: #{tpu_custom_call.1} parent=5 // pred_fallthru
        _
      %p278 = scmp.le.s32.totalorder 2, %s15
      // Predicated region
      $region41: #{tpu_custom_call.1} parent=5 // pred_check
        %p279 = pneg %p278
      $region42: #{tpu_custom_call.1} parent=5 // pred_check_branch
        %281 = sbr.rel (%p279) target = $region44
      $region43: #{tpu_custom_call.1} parent=5 // pred_region
        %s282 = ssub.s32 %s15, 2
        // Predicated region
        $region45: #{tpu_custom_call.1} parent=43 // pred_check
          %p283 = pneg %p91
        $region46: #{tpu_custom_call.1} parent=43 // pred_check_branch
          %285 = sbr.rel (%p283) target = $region48
        $region47: #{tpu_custom_call.1} parent=43 // pred_region
          %s286 = sand.u32 %s76, 1
          %s287 = scalar_lea.sflag [#allocation4], %s286
          %s288 = sand.u32 %s76, 1
          %s289 = smul.addr %s288, 64
          %s290 = scalar_lea.vmem [#allocation7], %s289
          %292 = dma.done %s287, 1024
        $region48: #{tpu_custom_call.1} parent=43 // pred_fallthru
          _
      $region44: #{tpu_custom_call.1} parent=5 // pred_fallthru
        _
    $region6: #{tpu_custom_call.1} parent=1 // loop_footer
      %s19 = sadd.s32 1, %s15
    $region7: #{tpu_custom_call.1} parent=1 // loop_footer_branch
      %14 = sbr.rel target = $region3
    $region8: #{tpu_custom_call.1} parent=1 // loop_exit
      _
    %293 = vsyncpa [#allocation3], 1
    %s294 = scalar_lea.sflag [#allocation3], 1
    %295 = vsyncpa %s294, 1
    %296 = vsyncpa [#allocation6], 1
    %297 = vsyncpa [#allocation4], 1
    %s298 = scalar_lea.sflag [#allocation4], 1
    %299 = vsyncpa %s298, 1

</llo_original>
